<compile_context>
chip_gen: v5e
topology: v5e:2x2
jax: 0.10.0
libtpu: 0.0.40
codegen_flags: <defaults>
</compile_context>

<pallas_src>
import jax
import jax.numpy as jnp
from jax.experimental import pallas as pl
from jax.experimental.pallas import tpu as pltpu


def _emd_kernel(tri_ref, pt_ref, pe_ref, out_ref):
    # tri_ref: (C, C) lower-triangular ones (resident); pt/pe: (C, TB); out: (1, TB)
    d = pe_ref[...] - pt_ref[...]                                   # (C, TB) f32
    # cumsum over the class (sublane) axis: cdf_diff[k, b] = sum_{j<=k} d[j, b]
    cdf_diff = jnp.dot(tri_ref[...], d,
                       preferred_element_type=jnp.float32)          # (C, TB)
    c = d.shape[0]
    mse = jnp.sum(cdf_diff * cdf_diff, axis=0, keepdims=True) * (1.0 / c)  # (1, TB)
    out_ref[...] = jnp.sqrt(mse)                                    # per-sample EMD


def emd_loss(p_target, p_estimate, *, block_b=None):
    assert p_target.shape == p_estimate.shape
    B, C = p_target.shape

    # Lane-dense layout: classes -> sublanes, batch -> lanes.
    pt = p_target.astype(jnp.float32).T     # (C, B)
    pe = p_estimate.astype(jnp.float32).T   # (C, B)

    b_up = pl.cdiv(B, 128) * 128
    if block_b is None:
        # Large lane-dense tiles saturate HBM BW; cap keeps VMEM ~4 MiB with
        # double-buffering (safe on v7x's 32 MiB scoped default).
        block_b = min(16384, b_up)
    else:
        block_b = max(128, pl.cdiv(block_b, 128) * 128)
    num_blocks = pl.cdiv(B, block_b)
    B_pad = num_blocks * block_b
    if B_pad != B:
        pad = B_pad - B
        # Zero padding -> d = 0 -> EMD contribution exactly 0 for padded rows.
        pt = jnp.pad(pt, ((0, 0), (0, pad)))
        pe = jnp.pad(pe, ((0, 0), (0, pad)))

    # Lower-triangular ones: tri[i, j] = 1.0 if j <= i  (the cumsum operator).
    row = jax.lax.broadcasted_iota(jnp.int32, (C, C), 0)
    col = jax.lax.broadcasted_iota(jnp.int32, (C, C), 1)
    tri = (col <= row).astype(jnp.float32)

    emd = pl.pallas_call(
        _emd_kernel,
        out_shape=jax.ShapeDtypeStruct((1, B_pad), jnp.float32),
        grid_spec=pltpu.PrefetchScalarGridSpec(
            num_scalar_prefetch=0,
            grid=(num_blocks,),
            in_specs=[
                pl.BlockSpec((C, C), lambda i: (0, 0)),        # tri: resident in VMEM
                pl.BlockSpec((C, block_b), lambda i: (0, i)),  # p_target block
                pl.BlockSpec((C, block_b), lambda i: (0, i)),  # p_estimate block
            ],
            out_specs=pl.BlockSpec((1, block_b), lambda i: (0, i)),  # lane-dense
        ),
        compiler_params=pltpu.CompilerParams(
            dimension_semantics=("parallel",),   # independent batch tiles (v7x 2 TCs)
        ),
    )(tri, pt, pe)

    # Padded samples contribute 0; divide by the true batch size.
    return jnp.sum(emd) / jnp.float32(B)


def _emd_loss_ref(p_target, p_estimate):
    cdf_t = jnp.cumsum(p_target, axis=1)
    cdf_e = jnp.cumsum(p_estimate, axis=1)
    diff = cdf_e - cdf_t
    samplewise = jnp.sqrt(jnp.mean(jnp.abs(diff) ** 2, axis=1))
    return jnp.mean(samplewise)


if __name__ == "__main__":
    key = jax.random.PRNGKey(0)
    k1, k2 = jax.random.split(key)

    # Small shape consistent with the module (10-class score distributions).
    B, C = 8, 10
    p_target = jax.nn.softmax(jax.random.normal(k1, (B, C), dtype=jnp.float32), axis=1)
    p_estimate = jax.nn.softmax(jax.random.normal(k2, (B, C), dtype=jnp.float32), axis=1)

    loss = emd_loss(p_target, p_estimate)
    jax.block_until_ready(loss)
    ref = _emd_loss_ref(p_target, p_estimate)
    assert jnp.allclose(loss, ref, atol=1e-5, rtol=1e-5), (loss, ref)

    # Larger, non-multiple batch: exercises the batch grid + zero-padding path.
    k3, k4 = jax.random.split(k2)
    B2 = 300
    p_target2 = jax.nn.softmax(jax.random.normal(k3, (B2, C), dtype=jnp.float32), axis=1)
    p_estimate2 = jax.nn.softmax(jax.random.normal(k4, (B2, C), dtype=jnp.float32), axis=1)

    loss2 = emd_loss(p_target2, p_estimate2, block_b=128)
    jax.block_until_ready(loss2)
    ref2 = _emd_loss_ref(p_target2, p_estimate2)
    assert jnp.allclose(loss2, ref2, atol=1e-5, rtol=1e-5), (loss2, ref2)

    print("KERNEL_OK")
</pallas_src>

<mosaic_0001>
module attributes {stable_mosaic.version = 11 : i64} {
  func.func @_emd_kernel(%arg0: i32, %arg1: memref<10x10xf32, #tpu.memory_space<vmem>>, %arg2: memref<10x128xf32, #tpu.memory_space<vmem>>, %arg3: memref<10x128xf32, #tpu.memory_space<vmem>>, %arg4: memref<1x128xf32, #tpu.memory_space<vmem>>) attributes {dimension_semantics = [#tpu.dimension_semantics<parallel>], iteration_bounds = array<i64: 1>, scalar_prefetch = 0 : i64, scratch_operands = 0 : i64, tpu.core_type = #tpu.core_type<tc>, window_params = [{pipeline_mode = #tpu.pipeline_mode<synchronous>, transform_indices = @transform_0, window_bounds = array<i64: 10, 10>}, {transform_indices = @transform_1, window_bounds = array<i64: 10, 128>}, {transform_indices = @transform_2, window_bounds = array<i64: 10, 128>}, {transform_indices = @transform_3, window_bounds = array<i64: 1, 128>}]} {
    %c0 = arith.constant 0 : index
    %c0_0 = arith.constant 0 : index
    %0 = vector.load %arg3[%c0, %c0_0] : memref<10x128xf32, #tpu.memory_space<vmem>>, vector<10x128xf32>
    %c0_1 = arith.constant 0 : index
    %c0_2 = arith.constant 0 : index
    %1 = vector.load %arg2[%c0_1, %c0_2] : memref<10x128xf32, #tpu.memory_space<vmem>>, vector<10x128xf32>
    %2 = arith.subf %0, %1 : vector<10x128xf32>
    %c0_3 = arith.constant 0 : index
    %c0_4 = arith.constant 0 : index
    %3 = vector.load %arg1[%c0_3, %c0_4] : memref<10x10xf32, #tpu.memory_space<vmem>>, vector<10x10xf32>
    %cst = arith.constant dense<0.000000e+00> : vector<10x128xf32>
    %4 = tpu.matmul %3, %2, %cst {dimension_numbers = #tpu.dot_dimension_numbers<[1], [0], [0], [1], [0, 0, 1, 1], [], []>} : vector<10x10xf32>, vector<10x128xf32>, vector<10x128xf32> -> vector<10x128xf32>
    %5 = arith.mulf %4, %4 : vector<10x128xf32>
    %cst_5 = arith.constant dense<0.000000e+00> : vector<128xf32>
    %6 = vector.multi_reduction <add>, %5, %cst_5 [0] : vector<10x128xf32> to vector<128xf32>
    %7 = vector.shape_cast %6 : vector<128xf32> to vector<1x128xf32>
    %cst_6 = arith.constant 1.000000e-01 : f32
    %8 = vector.broadcast %cst_6 : f32 to vector<1x128xf32>
    %9 = arith.mulf %7, %8 : vector<1x128xf32>
    %10 = math.sqrt %9 : vector<1x128xf32>
    %c0_7 = arith.constant 0 : index
    %c0_8 = arith.constant 0 : index
    %11 = vector.load %arg4[%c0_7, %c0_8] : memref<1x128xf32, #tpu.memory_space<vmem>>, vector<1x128xf32>
    tpu.vector_store %arg4[%c0_7, %c0_8], %10 {strides = array<i32>} : memref<1x128xf32, #tpu.memory_space<vmem>>, vector<1x128xf32>,
    return
  }
  func.func @transform_0(%arg0: i32) -> (i32, i32) {
    %c0_i32 = arith.constant 0 : i32
    %c0_i32_0 = arith.constant 0 : i32
    %c0_i32_1 = arith.constant 0 : i32
    return %c0_i32, %c0_i32_0 : i32, i32
  }
  func.func @transform_1(%arg0: i32) -> (i32, i32) {
    %c0_i32 = arith.constant 0 : i32
    %c0_i32_0 = arith.constant 0 : i32
    return %c0_i32, %arg0 : i32, i32
  }
  func.func @transform_2(%arg0: i32) -> (i32, i32) {
    %c0_i32 = arith.constant 0 : i32
    %c0_i32_0 = arith.constant 0 : i32
    return %c0_i32, %arg0 : i32, i32
  }
  func.func @transform_3(%arg0: i32) -> (i32, i32) {
    %c0_i32 = arith.constant 0 : i32
    %c0_i32_0 = arith.constant 0 : i32
    return %c0_i32, %arg0 : i32, i32
  }
}

</mosaic_0001>

<llo_original>
// kernel: tpu_custom_call.1
$region0: #{tpu_custom_call.1}
  #allocation0 [shape = 'u32[]', space=smem, size = 0x4, offset = 0x4, fixed_abs, tag = 'smem constant byte address 0x4 - core index']
  #allocation1 [shape = 'u32[72,128]{1,0:T(1,128)}', space=vmem, size = 0x9000, scoped, tag = 'internal scratch']
  %s0 = inlined_call_operand.hbm [shape: f32[10,10], index: 0, kind: input, shape index: {}]
  %s1 = inlined_call_operand.hbm [shape: f32[10,128], index: 1, kind: input, shape index: {}]
  %s2 = inlined_call_operand.hbm [shape: f32[10,128], index: 2, kind: input, shape index: {}]
  %s3 = inlined_call_operand.hbm [shape: f32[1,128], index: 3, kind: output, shape index: {}]
  %s4 = sld [smem:[#allocation0]]
  $region34: #{tpu_custom_call.1} parent=0
    _
  %s6 = ssub.s32 1, %s4
  %s7 = scalar_select 0, %s6, %s4
  $region1: #{tpu_custom_call.1} parent=0
    #allocation2 [shape = 'u8[8192]{0}', space=vmem, size = 0x2000, scoped, tag = 'input window, operand 0, single buffered']
    #allocation3 [shape = 's32[1]{0}', space=sflag, size = 0x4, scoped, tag = 'scoped memory for tpu_custom_call.1']
    #allocation4 [shape = 's32[1]{0}', space=sflag, size = 0x4, scoped, tag = 'scoped memory for tpu_custom_call.1']
    #allocation5 [shape = 'u8[8192]{0}', space=vmem, size = 0x2000, scoped, tag = 'input window, operand 1, single buffered']
    #allocation6 [shape = 's32[1]{0}', space=sflag, size = 0x4, scoped, tag = 'scoped memory for tpu_custom_call.1']
    #allocation7 [shape = 'u8[8192]{0}', space=vmem, size = 0x2000, scoped, tag = 'input window, operand 2, single buffered']
    #allocation8 [shape = 'u8[512]{0}', space=vmem, size = 0x400, scoped, tag = 'output window, operand 0, single buffered']
    %8 = vsyncpa [#allocation3], 0
    %9 = vsyncpa [#allocation6], 0
    %10 = vsyncpa [#allocation4], 0
    // Predicated region
    $region2: #{tpu_custom_call.1} parent=1 // pred_check
      _
    $region3: #{tpu_custom_call.1} parent=1 // pred_check_branch
      %12 = sbr.rel (0) target = $region5
    $region4: #{tpu_custom_call.1} parent=1 // pred_region
      %14 = vsyncadd [#allocation3], 0
      %s15 = sshll.u32 %s0, 4
      %s16 = int_to_ptr.hbm [resolvable:$true] %s15
      %s17 = sshll.u32 [#allocation2], 4
      %s18 = int_to_ptr.vmem [resolvable:$true] %s17
      %23 = dma.hbm_to_vmem [thread:$0]  %s16, 256, %s18, [#allocation3], 128, 128, 8
    $region5: #{tpu_custom_call.1} parent=1 // pred_fallthru
      _
    // Predicated region
    $region6: #{tpu_custom_call.1} parent=1 // pred_check
      _
    $region7: #{tpu_custom_call.1} parent=1 // pred_check_branch
      %25 = sbr.rel (0) target = $region9
    $region8: #{tpu_custom_call.1} parent=1 // pred_region
      %27 = vsyncadd [#allocation6], 0
      %s28 = sshll.u32 %s1, 4
      %s29 = int_to_ptr.hbm [resolvable:$true] %s28
      %s30 = sshll.u32 [#allocation5], 4
      %s31 = int_to_ptr.vmem [resolvable:$true] %s30
      %36 = dma.hbm_to_vmem [thread:$0]  %s29, 256, %s31, [#allocation6], 128, 128, 8
    $region9: #{tpu_custom_call.1} parent=1 // pred_fallthru
      _
    // Predicated region
    $region10: #{tpu_custom_call.1} parent=1 // pred_check
      _
    $region11: #{tpu_custom_call.1} parent=1 // pred_check_branch
      %38 = sbr.rel (0) target = $region13
    $region12: #{tpu_custom_call.1} parent=1 // pred_region
      %40 = vsyncadd [#allocation6], 0
      %s41 = sshll.u32 %s2, 4
      %s42 = int_to_ptr.hbm [resolvable:$true] %s41
      %s43 = sshll.u32 [#allocation7], 4
      %s44 = int_to_ptr.vmem [resolvable:$true] %s43
      %49 = dma.hbm_to_vmem [thread:$0]  %s42, 256, %s44, [#allocation6], 128, 128, 8
    $region13: #{tpu_custom_call.1} parent=1 // pred_fallthru
      _
    // Predicated region
    $region14: #{tpu_custom_call.1} parent=1 // pred_check
      _
    $region15: #{tpu_custom_call.1} parent=1 // pred_check_branch
      %51 = sbr.rel (0) target = $region17
    $region16: #{tpu_custom_call.1} parent=1 // pred_region
      %53 = dma.done [#allocation3], 256
    $region17: #{tpu_custom_call.1} parent=1 // pred_fallthru
      _
    // Predicated region
    $region18: #{tpu_custom_call.1} parent=1 // pred_check
      _
    $region19: #{tpu_custom_call.1} parent=1 // pred_check_branch
      %55 = sbr.rel (0) target = $region21
    $region20: #{tpu_custom_call.1} parent=1 // pred_region
      %57 = dma.done [#allocation6], 256
    $region21: #{tpu_custom_call.1} parent=1 // pred_fallthru
      _
    // Predicated region
    $region22: #{tpu_custom_call.1} parent=1 // pred_check
      _
    $region23: #{tpu_custom_call.1} parent=1 // pred_check_branch
      %59 = sbr.rel (0) target = $region25
    $region24: #{tpu_custom_call.1} parent=1 // pred_region
      %61 = dma.done [#allocation6], 256
    $region25: #{tpu_custom_call.1} parent=1 // pred_fallthru
      _
    %v62 = vld [vmem:[#allocation7] sm:$0xff]
    %v63 = vld [vmem:[#allocation7 + $0x8] sm:$0x3]
    %v64 = vld [vmem:[#allocation5] sm:$0xff]
    %v65 = vld [vmem:[#allocation5 + $0x8] sm:$0x3]
    %v66 = vsub.f32 %v62, %v64
    %v67 = vsub.f32 %v63, %v65
    %v68 = vld [vmem:[#allocation2] sm:$0xff]
    %v69 = vld [vmem:[#allocation2 + $0x8] sm:$0x3]
    %vm70 = vcmask 80896
    %v72 = vsel %vm70, %v68, 0
    %v75 = vsel %vm70, %v69, 0
    %vm77 = vcmask 1041408
    %v79 = vsel %vm77, %v67, 0
    %81 = vmatpush.msra.mxu0 0.0
    %82 = vmatpush.msra.mxu0 0.0
    %83 = vmatpush.msra.mxu0 0.0
    %84 = vmatpush.msra.mxu0 0.0
    %85 = vmatpush.msra.mxu0 0.0
    %86 = vmatpush.msra.mxu0 0.0
    %87 = vmatpush.msra.mxu0 0.0
    %88 = vmatpush.msra.mxu0 0.0
    %89 = vmatpush.msra.mxu0 0.0
    %90 = vmatpush.msra.mxu0 0.0
    %91 = vmatpush.msra.mxu0 0.0
    %92 = vmatpush.msra.mxu0 0.0
    %93 = vmatpush.msra.mxu0 0.0
    %94 = vmatpush.msra.mxu0 0.0
    %95 = vmatpush.msra.mxu0 %v79
    %96 = vmatpush.msra.mxu0 %v66
    %97 = vmatmul.f32.gmra.mxu0 %v72
    %v98 = vpop.f32.mrf.mxu0
    %v99 = vadd.f32 0.0, %v98
    %100 = vmatmul.f32.gmra.mxu0 %v75
    %v101 = vpop.f32.mrf.mxu0
    %v102 = vadd.f32 0.0, %v101
    %103 = vdwg.mxu0
    %v104 = vmul.f32 %v99, %v99
    %v105 = vmul.f32 %v102, %v102
    %v106 = vsel %vm77, %v105, 0.0
    %v107 = vadd.f32 %v104, %v106
    %v108 = vrot.slane %v107, 4
    %v109 = vadd.f32 %v107, %v108
    %v110 = vrot.slane %v109, 2
    %v111 = vadd.f32 %v109, %v110
    %v112 = vrot.slane %v111, 1
    %v113 = vadd.f32 %v111, %v112
    %v114 = vmul.f32 %v113, 0.1
    %v115 = vrsqrt.pop %v114
    %v116 = vmul.f32 %v115, %v114
    %v117 = vmul.f32 %v116, %v115
    %v118 = vmul.f32 0.5, %v117
    %v119 = vsub.f32 1.5, %v118
    %v120 = vmul.f32 %v115, %v119
    %v121 = vmul.f32 %v114, %v120
    %vm122 = vcmp.eq.f32.partialorder %v114, inf
    %v123 = vsel %vm122, %v114, %v121
    %vm124 = vcmp.eq.f32.partialorder %v114, 0.0
    %v125 = vand.u32 %v114, 2147483648
    %v126 = vsel %vm124, %v125, %v123
    %127 = vst [vmem:[#allocation8] sm:$0x1] %v126
    // Predicated region
    $region26: #{tpu_custom_call.1} parent=1 // pred_check
      _
    $region27: #{tpu_custom_call.1} parent=1 // pred_check_branch
      %129 = sbr.rel (0) target = $region29
    $region28: #{tpu_custom_call.1} parent=1 // pred_region
      %131 = vsyncadd [#allocation4], 0
      %s133 = sshll.u32 [#allocation8], 4
      %s134 = int_to_ptr.vmem [resolvable:$true] %s133
      %s135 = sshll.u32 %s3, 4
      %s136 = int_to_ptr.hbm [resolvable:$true] %s135
      %138 = dma.vmem_to_hbm [thread:$0]  %s134, 16, %s136, [#allocation4]
    $region29: #{tpu_custom_call.1} parent=1 // pred_fallthru
      _
    // Predicated region
    $region30: #{tpu_custom_call.1} parent=1 // pred_check
      _
    $region31: #{tpu_custom_call.1} parent=1 // pred_check_branch
      %140 = sbr.rel (0) target = $region33
    $region32: #{tpu_custom_call.1} parent=1 // pred_region
      %142 = dma.done [#allocation4], 16
    $region33: #{tpu_custom_call.1} parent=1 // pred_fallthru
      _
    %143 = vsyncpa [#allocation3], 1
    %144 = vsyncpa [#allocation6], 1
    %145 = vsyncpa [#allocation4], 1

</llo_original>
